<compile_context>
chip_gen: v5e
topology: v5e:2x2
jax: 0.10.0
libtpu: 0.0.40
codegen_flags: <defaults>
</compile_context>

<pallas_src>
import functools

import jax
import jax.numpy as jnp
from jax.experimental import pallas as pl
from jax.experimental.pallas import tpu as pltpu

H1 = 64
H2 = 32
LANE = 128


def _round_up(x, m):
    return ((x + m - 1) // m) * m


def _choose_tile(n, d, max_tile):
    """Row tile: ~2 MiB of f32 x per step, >=4 grid steps when batch allows,
    multiple of 128 (required by the lane-dense output block)."""
    tn = (2 * 1024 * 1024) // (d * 4)               # ~2 MiB of f32 x per step
    tn = min(tn, max_tile)
    tn = min(tn, max(LANE, _round_up(n, LANE) // 4))  # >=4 steps (2/TC on v7x)
    tn = max(LANE, (tn // LANE) * LANE)               # multiple of 128
    return tn


def ranknet_kernel(x_ref, w1_ref, b1_ref, w2_ref, b2_ref, w3_ref, b3_ref, o_ref):
    # In-kernel f32 -> bf16 cast of the streamed tile (hidden under the DMA).
    x = x_ref[...].astype(jnp.bfloat16)

    # Layer 1: Linear(D, 64) + ReLU   (Dropout == identity in eval mode)
    h1 = jnp.dot(x, w1_ref[...], preferred_element_type=jnp.float32)
    h1 = jnp.maximum(h1 + b1_ref[...], 0.0)

    # Layer 2: Linear(64, 32) + ReLU  (Dropout == identity in eval mode)
    h2 = jnp.dot(h1.astype(jnp.bfloat16), w2_ref[...],
                 preferred_element_type=jnp.float32)
    h2 = jnp.maximum(h2 + b2_ref[...], 0.0)

    # Layer 3: Linear(32, 1) as VPU multiply + lane reduction (avoids a
    # width-1 MXU matmul); b3 is a scalar in SMEM.
    score = jnp.sum(h2 * w3_ref[...], axis=-1, keepdims=True) + b3_ref[0, 0]

    # Relayout to the lane-dense output slab -> unmasked full-width stores.
    o_ref[...] = score.reshape(o_ref.shape).astype(o_ref.dtype)


@functools.partial(jax.jit, static_argnames=("tile_n",))
def ranknet_forward(x, params, *, tile_n=8192):
    """Eval-mode RankNet forward. x: (N, D) f32. Returns (N, 1) f32 scores."""
    w1, b1, w2, b2, w3, b3 = params
    n, d = x.shape

    tn = _choose_tile(n, d, tile_n)
    n_pad = _round_up(n, tn)
    if n_pad != n:
        x = jnp.pad(x, ((0, n_pad - n), (0, 0)))

    # Resident operands: bf16 matmul weights, f32 biases / layer-3 row.
    w1_c = w1.astype(jnp.bfloat16)
    w2_c = w2.astype(jnp.bfloat16)
    b1_c = b1.reshape(1, H1).astype(jnp.float32)
    b2_c = b2.reshape(1, H2).astype(jnp.float32)
    w3_row = w3.reshape(1, H2).astype(jnp.float32)     # transposed (1, 32)
    b3_c = b3.reshape(1, 1).astype(jnp.float32)        # scalar, lives in SMEM

    grid = (n_pad // tn,)
    tile_rows_out = tn // LANE                          # lane-dense output rows

    # VMEM budget (double-buffered x + output slab + resident weights),
    # clamped to [32 MiB, 48 MiB] for v5e scoped default / v7x 64 MiB physical.
    vmem_needed = (2 * tn * d * 4                       # x f32, double-buffered
                   + 2 * tn * 4                         # output slab, double-buffered
                   + 2 * (d * H1 * 2 + H1 * H2 * 2)     # bf16 weights
                   + 2 * 4 * (H1 + H2 + H2))            # f32 biases + w3 row
    vmem_limit = int(min(48 * 1024 * 1024,
                         max(32 * 1024 * 1024, 2 * vmem_needed)))

    flops = 2 * n_pad * (d * H1 + H1 * H2 + H2)
    bytes_accessed = (n_pad * d * 4 + n_pad * 4
                      + d * H1 * 2 + H1 * H2 * 2 + 4 * (H1 + 2 * H2 + 1))

    out = pl.pallas_call(
        ranknet_kernel,
        out_shape=jax.ShapeDtypeStruct((grid[0], tile_rows_out, LANE),
                                       jnp.float32),
        grid=grid,
        in_specs=[
            # x: streamed f32 over the batch grid axis (cast in-kernel).
            pl.BlockSpec((tn, d), lambda i: (i, 0)),
            # Weights / biases: constant index map -> VMEM-resident.
            pl.BlockSpec((d, H1), lambda i: (0, 0)),
            pl.BlockSpec((1, H1), lambda i: (0, 0)),
            pl.BlockSpec((H1, H2), lambda i: (0, 0)),
            pl.BlockSpec((1, H2), lambda i: (0, 0)),
            pl.BlockSpec((1, H2), lambda i: (0, 0)),    # w3 row (f32)
            # b3: scalar in SMEM (no 8x128-padded VMEM tile / DMA).
            pl.BlockSpec(memory_space=pltpu.SMEM),
        ],
        # Lane-dense output block: (1, tn//128, 128) -> unmasked vst.
        out_specs=pl.BlockSpec((1, tile_rows_out, LANE), lambda i: (i, 0, 0)),
        compiler_params=pltpu.CompilerParams(
            dimension_semantics=("parallel",),          # dual-TC sharding on v7x
            vmem_limit_bytes=vmem_limit,
        ),
        cost_estimate=pl.CostEstimate(
            flops=flops, transcendentals=0, bytes_accessed=bytes_accessed),
    )(x, w1_c, b1_c, w2_c, b2_c, w3_row, b3_c)

    # (grid, tn//128, 128) -> (n_pad, 1) -> (n, 1); row-major flatten preserves
    # the original batch order.
    return out.reshape(n_pad, 1)[:n]


def init_params(key, input_size):
    """Deterministic init mimicking PyTorch Linear (uniform(-1/sqrt(fan_in), +))."""
    ks = jax.random.split(key, 6)

    def lin(kw, kb, fan_in, fan_out):
        bound = 1.0 / jnp.sqrt(fan_in)
        # stored as (in, out) so kernel does x @ W
        w = jax.random.uniform(kw, (fan_in, fan_out), jnp.float32, -bound, bound)
        b = jax.random.uniform(kb, (1, fan_out), jnp.float32, -bound, bound)
        return w, b

    w1, b1 = lin(ks[0], ks[1], input_size, H1)
    w2, b2 = lin(ks[2], ks[3], H1, H2)
    w3, b3 = lin(ks[4], ks[5], H2, 1)
    return (w1, b1, w2, b2, w3, b3)


def _reference(x, params):
    """Pure-JAX reference with the same bf16-input / f32-accum numerics."""
    w1, b1, w2, b2, w3, b3 = params
    f32 = jnp.float32
    xc = x.astype(jnp.bfloat16).astype(f32)
    w1c = w1.astype(jnp.bfloat16).astype(f32)
    w2c = w2.astype(jnp.bfloat16).astype(f32)
    h1 = jnp.maximum(xc @ w1c + b1, 0.0)
    h1c = h1.astype(jnp.bfloat16).astype(f32)
    h2 = jnp.maximum(h1c @ w2c + b2, 0.0)
    return jnp.sum(h2 * w3.reshape(1, -1), axis=-1, keepdims=True) + b3.reshape(1, 1)


if __name__ == "__main__":
    key = jax.random.PRNGKey(0)
    k_param, k_x = jax.random.split(key)

    batch = 8
    input_size = 32

    params = init_params(k_param, input_size)
    x = jax.random.normal(k_x, (batch, input_size), dtype=jnp.float32)

    out = ranknet_forward(x, params)
    out = jax.block_until_ready(out)

    ref = _reference(x, params)
    assert out.shape == (batch, 1)
    assert jnp.allclose(out, ref, atol=1e-3, rtol=1e-3), (
        f"max abs err {jnp.max(jnp.abs(out - ref))}")

    print("KERNEL_OK")
</pallas_src>

<mosaic_0001>
module attributes {stable_mosaic.version = 11 : i64} {
  func.func @ranknet_kernel(%arg0: i32, %arg1: memref<128x32xf32, #tpu.memory_space<vmem>>, %arg2: memref<32x64xbf16, #tpu.memory_space<vmem>>, %arg3: memref<1x64xf32, #tpu.memory_space<vmem>>, %arg4: memref<64x32xbf16, #tpu.memory_space<vmem>>, %arg5: memref<1x32xf32, #tpu.memory_space<vmem>>, %arg6: memref<1x32xf32, #tpu.memory_space<vmem>>, %arg7: memref<1x1xf32, #tpu.memory_space<smem>>, %arg8: memref<1x1x128xf32, #tpu.memory_space<vmem>>) attributes {dimension_semantics = [#tpu.dimension_semantics<parallel>], iteration_bounds = array<i64: 1>, scalar_prefetch = 0 : i64, scratch_operands = 0 : i64, tpu.core_type = #tpu.core_type<tc>, window_params = [{transform_indices = @transform_0, window_bounds = array<i64: 128, 32>}, {pipeline_mode = #tpu.pipeline_mode<synchronous>, transform_indices = @transform_1, window_bounds = array<i64: 32, 64>}, {pipeline_mode = #tpu.pipeline_mode<synchronous>, transform_indices = @transform_2, window_bounds = array<i64: 1, 64>}, {pipeline_mode = #tpu.pipeline_mode<synchronous>, transform_indices = @transform_3, window_bounds = array<i64: 64, 32>}, {pipeline_mode = #tpu.pipeline_mode<synchronous>, transform_indices = @transform_4, window_bounds = array<i64: 1, 32>}, {pipeline_mode = #tpu.pipeline_mode<synchronous>, transform_indices = @transform_5, window_bounds = array<i64: 1, 32>}, {transform_indices = @transform_6, window_bounds = array<i64: 1, 1>}, {transform_indices = @transform_7, window_bounds = array<i64: 1, 1, 128>}]} {
    %c0 = arith.constant 0 : index
    %c0_0 = arith.constant 0 : index
    %0 = vector.load %arg1[%c0, %c0_0] : memref<128x32xf32, #tpu.memory_space<vmem>>, vector<128x32xf32>
    %1 = arith.truncf %0 : vector<128x32xf32> to vector<128x32xbf16>
    %c0_1 = arith.constant 0 : index
    %c0_2 = arith.constant 0 : index
    %2 = vector.load %arg2[%c0_1, %c0_2] : memref<32x64xbf16, #tpu.memory_space<vmem>>, vector<32x64xbf16>
    %cst = arith.constant dense<0.000000e+00> : vector<128x64xf32>
    %3 = tpu.matmul %1, %2, %cst {dimension_numbers = #tpu.dot_dimension_numbers<[1], [0], [0], [1], [0, 0, 1, 1], [], []>} : vector<128x32xbf16>, vector<32x64xbf16>, vector<128x64xf32> -> vector<128x64xf32>
    %c0_3 = arith.constant 0 : index
    %c0_4 = arith.constant 0 : index
    %4 = vector.load %arg3[%c0_3, %c0_4] : memref<1x64xf32, #tpu.memory_space<vmem>>, vector<1x64xf32>
    %5 = vector.broadcast %4 : vector<1x64xf32> to vector<128x64xf32>
    %6 = arith.addf %3, %5 : vector<128x64xf32>
    %cst_5 = arith.constant 0.000000e+00 : f32
    %7 = vector.broadcast %cst_5 : f32 to vector<128x64xf32>
    %8 = arith.maximumf %6, %7 : vector<128x64xf32>
    %9 = arith.truncf %8 : vector<128x64xf32> to vector<128x64xbf16>
    %c0_6 = arith.constant 0 : index
    %c0_7 = arith.constant 0 : index
    %10 = vector.load %arg4[%c0_6, %c0_7] : memref<64x32xbf16, #tpu.memory_space<vmem>>, vector<64x32xbf16>
    %cst_8 = arith.constant dense<0.000000e+00> : vector<128x32xf32>
    %11 = tpu.matmul %9, %10, %cst_8 {dimension_numbers = #tpu.dot_dimension_numbers<[1], [0], [0], [1], [0, 0, 1, 1], [], []>} : vector<128x64xbf16>, vector<64x32xbf16>, vector<128x32xf32> -> vector<128x32xf32>
    %c0_9 = arith.constant 0 : index
    %c0_10 = arith.constant 0 : index
    %12 = vector.load %arg5[%c0_9, %c0_10] : memref<1x32xf32, #tpu.memory_space<vmem>>, vector<1x32xf32>
    %13 = vector.broadcast %12 : vector<1x32xf32> to vector<128x32xf32>
    %14 = arith.addf %11, %13 : vector<128x32xf32>
    %cst_11 = arith.constant 0.000000e+00 : f32
    %15 = vector.broadcast %cst_11 : f32 to vector<128x32xf32>
    %16 = arith.maximumf %14, %15 : vector<128x32xf32>
    %c0_12 = arith.constant 0 : index
    %c0_13 = arith.constant 0 : index
    %17 = vector.load %arg6[%c0_12, %c0_13] : memref<1x32xf32, #tpu.memory_space<vmem>>, vector<1x32xf32>
    %18 = vector.broadcast %17 : vector<1x32xf32> to vector<128x32xf32>
    %19 = arith.mulf %16, %18 : vector<128x32xf32>
    %cst_14 = arith.constant dense<0.000000e+00> : vector<128xf32>
    %20 = vector.multi_reduction <add>, %19, %cst_14 [1] : vector<128x32xf32> to vector<128xf32>
    %21 = vector.shape_cast %20 : vector<128xf32> to vector<128x1xf32>
    %c0_15 = arith.constant 0 : index
    %c0_16 = arith.constant 0 : index
    %22 = memref.load %arg7[%c0_15, %c0_16] : memref<1x1xf32, #tpu.memory_space<smem>>
    %23 = vector.broadcast %22 : f32 to vector<128x1xf32>
    %24 = arith.addf %21, %23 : vector<128x1xf32>
    %25 = vector.shape_cast %24 : vector<128x1xf32> to vector<1x1x128xf32>
    %c0_17 = arith.constant 0 : index
    %c0_18 = arith.constant 0 : index
    %c0_19 = arith.constant 0 : index
    %26 = vector.load %arg8[%c0_17, %c0_18, %c0_19] : memref<1x1x128xf32, #tpu.memory_space<vmem>>, vector<1x1x128xf32>
    tpu.vector_store %arg8[%c0_17, %c0_18, %c0_19], %25 {strides = array<i32>} : memref<1x1x128xf32, #tpu.memory_space<vmem>>, vector<1x1x128xf32>,
    return
  }
  func.func @transform_0(%arg0: i32) -> (i32, i32) {
    %c0_i32 = arith.constant 0 : i32
    %c0_i32_0 = arith.constant 0 : i32
    return %arg0, %c0_i32 : i32, i32
  }
  func.func @transform_1(%arg0: i32) -> (i32, i32) {
    %c0_i32 = arith.constant 0 : i32
    %c0_i32_0 = arith.constant 0 : i32
    %c0_i32_1 = arith.constant 0 : i32
    return %c0_i32, %c0_i32_0 : i32, i32
  }
  func.func @transform_2(%arg0: i32) -> (i32, i32) {
    %c0_i32 = arith.constant 0 : i32
    %c0_i32_0 = arith.constant 0 : i32
    %c0_i32_1 = arith.constant 0 : i32
    return %c0_i32, %c0_i32_0 : i32, i32
  }
  func.func @transform_3(%arg0: i32) -> (i32, i32) {
    %c0_i32 = arith.constant 0 : i32
    %c0_i32_0 = arith.constant 0 : i32
    %c0_i32_1 = arith.constant 0 : i32
    return %c0_i32, %c0_i32_0 : i32, i32
  }
  func.func @transform_4(%arg0: i32) -> (i32, i32) {
    %c0_i32 = arith.constant 0 : i32
    %c0_i32_0 = arith.constant 0 : i32
    %c0_i32_1 = arith.constant 0 : i32
    return %c0_i32, %c0_i32_0 : i32, i32
  }
  func.func @transform_5(%arg0: i32) -> (i32, i32) {
    %c0_i32 = arith.constant 0 : i32
    %c0_i32_0 = arith.constant 0 : i32
    %c0_i32_1 = arith.constant 0 : i32
    return %c0_i32, %c0_i32_0 : i32, i32
  }
  func.func @transform_6(%arg0: i32) -> (i32, i32) {
    %c0_i32 = arith.constant 0 : i32
    %c0_i32_0 = arith.constant 0 : i32
    %c0_i32_1 = arith.constant 0 : i32
    return %c0_i32, %c0_i32_0 : i32, i32
  }
  func.func @transform_7(%arg0: i32) -> (i32, i32, i32) {
    %c0_i32 = arith.constant 0 : i32
    %c0_i32_0 = arith.constant 0 : i32
    %c0_i32_1 = arith.constant 0 : i32
    return %arg0, %c0_i32, %c0_i32_0 : i32, i32, i32
  }
}

</mosaic_0001>

<llo_original>
// kernel: ranknet_forward.1
$region0: #{ranknet_forward.1}
  #allocation0 [shape = 'u32[]', space=smem, size = 0x4, offset = 0x4, fixed_abs, tag = 'smem constant byte address 0x4 - core index']
  #allocation1 [shape = 'u32[72,128]{1,0:T(1,128)}', space=vmem, size = 0x9000, scoped, tag = 'internal scratch']
  #allocation2 [shape = 'f32[1,1]{1,0:T(1,128)S(6)}', space=smem, size = 0x200, scoped, tag = 'scoped memory for ranknet_forward.1']
  %s0 = inlined_call_operand.vmem [shape: f32[128,32], index: 0, kind: input, shape index: {}]
  %s1 = inlined_call_operand.vmem [shape: bf16[32,64], index: 1, kind: input, shape index: {}]
  %s2 = inlined_call_operand.vmem [shape: f32[1,64], index: 2, kind: input, shape index: {}]
  %s3 = inlined_call_operand.vmem [shape: bf16[64,32], index: 3, kind: input, shape index: {}]
  %s4 = inlined_call_operand.vmem [shape: f32[1,32], index: 4, kind: input, shape index: {}]
  %s5 = inlined_call_operand.vmem [shape: f32[1,32], index: 5, kind: input, shape index: {}]
  %s6 = inlined_call_operand.<no memory space> [shape: f32[1,1], index: 6, kind: input, shape index: {}]
  %s7 = inlined_call_operand.vmem [shape: f32[1,1,128], index: 7, kind: output, shape index: {}]
  %s8 = sld [smem:[#allocation0]]
  $region38: #{ranknet_forward.1} parent=0
    _
  %s10 = ssub.s32 1, %s8
  %s11 = scalar_select 0, %s10, %s8
  %12 = sst [smem:[#allocation2]] %s6
  // Predicated region
  $region2: #{ranknet_forward.1} parent=0 // pred_check
    _
  $region3: #{ranknet_forward.1} parent=0 // pred_check_branch
    %14 = sbr.rel (0) target = $region5
  $region4: #{ranknet_forward.1} parent=0 // pred_region
    _
  $region5: #{ranknet_forward.1} parent=0 // pred_fallthru
    _
  // Predicated region
  $region6: #{ranknet_forward.1} parent=0 // pred_check
    _
  $region7: #{ranknet_forward.1} parent=0 // pred_check_branch
    %16 = sbr.rel (0) target = $region9
  $region8: #{ranknet_forward.1} parent=0 // pred_region
    _
  $region9: #{ranknet_forward.1} parent=0 // pred_fallthru
    _
  // Predicated region
  $region10: #{ranknet_forward.1} parent=0 // pred_check
    _
  $region11: #{ranknet_forward.1} parent=0 // pred_check_branch
    %18 = sbr.rel (0) target = $region13
  $region12: #{ranknet_forward.1} parent=0 // pred_region
    _
  $region13: #{ranknet_forward.1} parent=0 // pred_fallthru
    _
  // Predicated region
  $region14: #{ranknet_forward.1} parent=0 // pred_check
    _
  $region15: #{ranknet_forward.1} parent=0 // pred_check_branch
    %20 = sbr.rel (0) target = $region17
  $region16: #{ranknet_forward.1} parent=0 // pred_region
    _
  $region17: #{ranknet_forward.1} parent=0 // pred_fallthru
    _
  // Predicated region
  $region18: #{ranknet_forward.1} parent=0 // pred_check
    _
  $region19: #{ranknet_forward.1} parent=0 // pred_check_branch
    %22 = sbr.rel (0) target = $region21
  $region20: #{ranknet_forward.1} parent=0 // pred_region
    _
  $region21: #{ranknet_forward.1} parent=0 // pred_fallthru
    _
  // Predicated region
  $region22: #{ranknet_forward.1} parent=0 // pred_check
    _
  $region23: #{ranknet_forward.1} parent=0 // pred_check_branch
    %24 = sbr.rel (0) target = $region25
  $region24: #{ranknet_forward.1} parent=0 // pred_region
    _
  $region25: #{ranknet_forward.1} parent=0 // pred_fallthru
    _
  // Predicated region
  $region26: #{ranknet_forward.1} parent=0 // pred_check
    _
  $region27: #{ranknet_forward.1} parent=0 // pred_check_branch
    %26 = sbr.rel (0) target = $region29
  $region28: #{ranknet_forward.1} parent=0 // pred_region
    _
  $region29: #{ranknet_forward.1} parent=0 // pred_fallthru
    _
  %v28 = vld [vmem:[%s0] sm:$0xff]
  %v29 = vld [vmem:[%s0 + $0x8] sm:$0xff]
  %v30 = vld [vmem:[%s0 + $0x10] sm:$0xff]
  %v31 = vld [vmem:[%s0 + $0x18] sm:$0xff]
  %v32 = vld [vmem:[%s0 + $0x20] sm:$0xff]
  %v33 = vld [vmem:[%s0 + $0x28] sm:$0xff]
  %v34 = vld [vmem:[%s0 + $0x30] sm:$0xff]
  %v35 = vld [vmem:[%s0 + $0x38] sm:$0xff]
  %v36 = vld [vmem:[%s0 + $0x40] sm:$0xff]
  %v37 = vld [vmem:[%s0 + $0x48] sm:$0xff]
  %v38 = vld [vmem:[%s0 + $0x50] sm:$0xff]
  %v39 = vld [vmem:[%s0 + $0x58] sm:$0xff]
  %v40 = vld [vmem:[%s0 + $0x60] sm:$0xff]
  %v41 = vld [vmem:[%s0 + $0x68] sm:$0xff]
  %v42 = vld [vmem:[%s0 + $0x70] sm:$0xff]
  %v43 = vld [vmem:[%s0 + $0x78] sm:$0xff]
  %v44 = vpack.c.bf16 %v29, %v28
  %v45 = vpack.c.bf16 %v31, %v30
  %v46 = vpack.c.bf16 %v33, %v32
  %v47 = vpack.c.bf16 %v35, %v34
  %v48 = vpack.c.bf16 %v37, %v36
  %v49 = vpack.c.bf16 %v39, %v38
  %v50 = vpack.c.bf16 %v41, %v40
  %v51 = vpack.c.bf16 %v43, %v42
  %v52 = vld [vmem:[%s1] sm:$0xf]
  %v53 = vld [vmem:[%s1 + $0x4] sm:$0xf]
  %v54 = vld [vmem:[%s1 + $0x8] sm:$0xf]
  %v55 = vld [vmem:[%s1 + $0xc] sm:$0xf]
  %v56 = vld [vmem:[%s2] sm:$0x1]
  %v58 = vperm.slane %v56, 0
  %v64 = vunpack.c.l.b16 %v52
  %v65 = vunpack.c.l.b16 %v53
  %v66 = vunpack.c.l.b16 %v54
  %v67 = vunpack.c.l.b16 %v55
  %v68 = vpack.c.b16 %v65, %v64
  %v69 = vpack.c.b16 %v67, %v66
  %vm72 = vcmask 261120
  %v74 = vsel %vm72, %v44, 0
  %v77 = vsel %vm72, %v45, 0
  %v80 = vsel %vm72, %v46, 0
  %v83 = vsel %vm72, %v47, 0
  %v86 = vsel %vm72, %v48, 0
  %v89 = vsel %vm72, %v49, 0
  %v92 = vsel %vm72, %v50, 0
  %v95 = vsel %vm72, %v51, 0
  %97 = vmatpush.bf16.msra.mxu0 0
  %98 = vmatpush.bf16.msra.mxu0 0
  %99 = vmatpush.bf16.msra.mxu0 0
  %100 = vmatpush.bf16.msra.mxu0 0
  %101 = vmatpush.bf16.msra.mxu0 0
  %102 = vmatpush.bf16.msra.mxu0 0
  %103 = vmatpush.bf16.msra.mxu0 %v69
  %104 = vmatpush.bf16.msra.mxu0 %v68
  %105 = vmatmul.bf16.gmra.mxu0 %v74
  %v106 = vpop.f32.mrf.mxu0
  %v107 = vadd.f32 %v58, %v106
  %v108 = vpop.f32.mrf.mxu0
  %v109 = vadd.f32 %v58, %v108
  %110 = vmatmul.bf16.gmra.mxu0 %v77
  %v111 = vpop.f32.mrf.mxu0
  %v112 = vadd.f32 %v58, %v111
  %v113 = vpop.f32.mrf.mxu0
  %v114 = vadd.f32 %v58, %v113
  %115 = vmatmul.bf16.gmra.mxu0 %v80
  %v116 = vpop.f32.mrf.mxu0
  %v117 = vadd.f32 %v58, %v116
  %v118 = vpop.f32.mrf.mxu0
  %v119 = vadd.f32 %v58, %v118
  %120 = vmatmul.bf16.gmra.mxu0 %v83
  %v121 = vpop.f32.mrf.mxu0
  %v122 = vadd.f32 %v58, %v121
  %v123 = vpop.f32.mrf.mxu0
  %v124 = vadd.f32 %v58, %v123
  %125 = vmatmul.bf16.gmra.mxu0 %v86
  %v126 = vpop.f32.mrf.mxu0
  %v127 = vadd.f32 %v58, %v126
  %v128 = vpop.f32.mrf.mxu0
  %v129 = vadd.f32 %v58, %v128
  %130 = vmatmul.bf16.gmra.mxu0 %v89
  %v131 = vpop.f32.mrf.mxu0
  %v132 = vadd.f32 %v58, %v131
  %v133 = vpop.f32.mrf.mxu0
  %v134 = vadd.f32 %v58, %v133
  %135 = vmatmul.bf16.gmra.mxu0 %v92
  %v136 = vpop.f32.mrf.mxu0
  %v137 = vadd.f32 %v58, %v136
  %v138 = vpop.f32.mrf.mxu0
  %v139 = vadd.f32 %v58, %v138
  %140 = vmatmul.bf16.gmra.mxu0 %v95
  %v141 = vpop.f32.mrf.mxu0
  %v142 = vadd.f32 %v58, %v141
  %v143 = vpop.f32.mrf.mxu0
  %v144 = vadd.f32 %v58, %v143
  %145 = vdwg.mxu0
  %v146 = vmax.f32 %v107, 0.0
  %v147 = vmax.f32 %v109, 0.0
  %v148 = vmax.f32 %v112, 0.0
  %v149 = vmax.f32 %v114, 0.0
  %v150 = vmax.f32 %v117, 0.0
  %v151 = vmax.f32 %v119, 0.0
  %v152 = vmax.f32 %v122, 0.0
  %v153 = vmax.f32 %v124, 0.0
  %v154 = vmax.f32 %v127, 0.0
  %v155 = vmax.f32 %v129, 0.0
  %v156 = vmax.f32 %v132, 0.0
  %v157 = vmax.f32 %v134, 0.0
  %v158 = vmax.f32 %v137, 0.0
  %v159 = vmax.f32 %v139, 0.0
  %v160 = vmax.f32 %v142, 0.0
  %v161 = vmax.f32 %v144, 0.0
  %v162 = vpack.c.bf16 %v147, %v146
  %v163 = vpack.c.bf16 %v149, %v148
  %v164 = vpack.c.bf16 %v151, %v150
  %v165 = vpack.c.bf16 %v153, %v152
  %v166 = vpack.c.bf16 %v155, %v154
  %v167 = vpack.c.bf16 %v157, %v156
  %v168 = vpack.c.bf16 %v159, %v158
  %v169 = vpack.c.bf16 %v161, %v160
  %v170 = vld [vmem:[%s3] sm:$0xf]
  %v171 = vld [vmem:[%s3 + $0x4] sm:$0xf]
  %v172 = vld [vmem:[%s3 + $0x8] sm:$0xf]
  %v173 = vld [vmem:[%s3 + $0xc] sm:$0xf]
  %v174 = vld [vmem:[%s3 + $0x10] sm:$0xf]
  %v175 = vld [vmem:[%s3 + $0x14] sm:$0xf]
  %v176 = vld [vmem:[%s3 + $0x18] sm:$0xf]
  %v177 = vld [vmem:[%s3 + $0x1c] sm:$0xf]
  %v178 = vld [vmem:[%s4] sm:$0x1]
  %v180 = vperm.slane %v178, 0
  %v190 = vunpack.c.l.b16 %v170
  %v191 = vunpack.c.l.b16 %v171
  %v192 = vunpack.c.l.b16 %v172
  %v193 = vunpack.c.l.b16 %v173
  %v194 = vunpack.c.l.b16 %v174
  %v195 = vunpack.c.l.b16 %v175
  %v196 = vunpack.c.l.b16 %v176
  %v197 = vunpack.c.l.b16 %v177
  %v198 = vpack.c.b16 %v191, %v190
  %v199 = vpack.c.b16 %v193, %v192
  %v200 = vpack.c.b16 %v195, %v194
  %v201 = vpack.c.b16 %v197, %v196
  %vm206 = vcmask 523264
  %v208 = vsel %vm206, %v162, 0
  %v211 = vsel %vm206, %v163, 0
  %v214 = vsel %vm206, %v164, 0
  %v217 = vsel %vm206, %v165, 0
  %v220 = vsel %vm206, %v166, 0
  %v223 = vsel %vm206, %v167, 0
  %v226 = vsel %vm206, %v168, 0
  %v229 = vsel %vm206, %v169, 0
  %231 = vmatpush.bf16.msra.mxu0 0
  %232 = vmatpush.bf16.msra.mxu0 0
  %233 = vmatpush.bf16.msra.mxu0 0
  %234 = vmatpush.bf16.msra.mxu0 0
  %235 = vmatpush.bf16.msra.mxu0 %v201
  %236 = vmatpush.bf16.msra.mxu0 %v200
  %237 = vmatpush.bf16.msra.mxu0 %v199
  %238 = vmatpush.bf16.msra.mxu0 %v198
  %239 = vmatmul.bf16.gmra.mxu0 %v208
  %v240 = vpop.f32.mrf.mxu0
  %v241 = vadd.f32 %v180, %v240
  %v242 = vpop.f32.mrf.mxu0
  %v243 = vadd.f32 %v180, %v242
  %244 = vmatmul.bf16.gmra.mxu0 %v211
  %v245 = vpop.f32.mrf.mxu0
  %v246 = vadd.f32 %v180, %v245
  %v247 = vpop.f32.mrf.mxu0
  %v248 = vadd.f32 %v180, %v247
  %249 = vmatmul.bf16.gmra.mxu0 %v214
  %v250 = vpop.f32.mrf.mxu0
  %v251 = vadd.f32 %v180, %v250
  %v252 = vpop.f32.mrf.mxu0
  %v253 = vadd.f32 %v180, %v252
  %254 = vmatmul.bf16.gmra.mxu0 %v217
  %v255 = vpop.f32.mrf.mxu0
  %v256 = vadd.f32 %v180, %v255
  %v257 = vpop.f32.mrf.mxu0
  %v258 = vadd.f32 %v180, %v257
  %259 = vmatmul.bf16.gmra.mxu0 %v220
  %v260 = vpop.f32.mrf.mxu0
  %v261 = vadd.f32 %v180, %v260
  %v262 = vpop.f32.mrf.mxu0
  %v263 = vadd.f32 %v180, %v262
  %264 = vmatmul.bf16.gmra.mxu0 %v223
  %v265 = vpop.f32.mrf.mxu0
  %v266 = vadd.f32 %v180, %v265
  %v267 = vpop.f32.mrf.mxu0
  %v268 = vadd.f32 %v180, %v267
  %269 = vmatmul.bf16.gmra.mxu0 %v226
  %v270 = vpop.f32.mrf.mxu0
  %v271 = vadd.f32 %v180, %v270
  %v272 = vpop.f32.mrf.mxu0
  %v273 = vadd.f32 %v180, %v272
  %274 = vmatmul.bf16.gmra.mxu0 %v229
  %v275 = vpop.f32.mrf.mxu0
  %v276 = vadd.f32 %v180, %v275
  %v277 = vpop.f32.mrf.mxu0
  %v278 = vadd.f32 %v180, %v277
  %279 = vdwg.mxu0
  %v280 = vmax.f32 %v241, 0.0
  %v281 = vmax.f32 %v243, 0.0
  %v282 = vmax.f32 %v246, 0.0
  %v283 = vmax.f32 %v248, 0.0
  %v284 = vmax.f32 %v251, 0.0
  %v285 = vmax.f32 %v253, 0.0
  %v286 = vmax.f32 %v256, 0.0
  %v287 = vmax.f32 %v258, 0.0
  %v288 = vmax.f32 %v261, 0.0
  %v289 = vmax.f32 %v263, 0.0
  %v290 = vmax.f32 %v266, 0.0
  %v291 = vmax.f32 %v268, 0.0
  %v292 = vmax.f32 %v271, 0.0
  %v293 = vmax.f32 %v273, 0.0
  %v294 = vmax.f32 %v276, 0.0
  %v295 = vmax.f32 %v278, 0.0
  %v296 = vld [vmem:[%s5] sm:$0x1]
  %v298 = vperm.slane %v296, 0
  %v300 = vmul.f32 %v280, %v298
  %v301 = vmul.f32 %v281, %v298
  %v302 = vmul.f32 %v282, %v298
  %v303 = vmul.f32 %v283, %v298
  %v304 = vmul.f32 %v284, %v298
  %v305 = vmul.f32 %v285, %v298
  %v306 = vmul.f32 %v286, %v298
  %v307 = vmul.f32 %v287, %v298
  %v308 = vmul.f32 %v288, %v298
  %v309 = vmul.f32 %v289, %v298
  %v310 = vmul.f32 %v290, %v298
  %v311 = vmul.f32 %v291, %v298
  %v312 = vmul.f32 %v292, %v298
  %v313 = vmul.f32 %v293, %v298
  %v314 = vmul.f32 %v294, %v298
  %v315 = vmul.f32 %v295, %v298
  %v316 = vsel %vm72, %v300, 0.0
  %317 = vadd.xlane.f32.xlu0 %v316
  %v318 = vpop.xlane.xlu0 %317
  %v319 = vsel %vm72, %v301, 0.0
  %320 = vadd.xlane.f32.xlu0 %v319
  %v321 = vpop.xlane.xlu0 %320
  %v322 = vsel %vm72, %v302, 0.0
  %323 = vadd.xlane.f32.xlu0 %v322
  %v324 = vpop.xlane.xlu0 %323
  %v325 = vsel %vm72, %v303, 0.0
  %326 = vadd.xlane.f32.xlu0 %v325
  %v327 = vpop.xlane.xlu0 %326
  %v328 = vsel %vm72, %v304, 0.0
  %329 = vadd.xlane.f32.xlu0 %v328
  %v330 = vpop.xlane.xlu0 %329
  %v331 = vsel %vm72, %v305, 0.0
  %332 = vadd.xlane.f32.xlu0 %v331
  %v333 = vpop.xlane.xlu0 %332
  %v334 = vsel %vm72, %v306, 0.0
  %335 = vadd.xlane.f32.xlu0 %v334
  %v336 = vpop.xlane.xlu0 %335
  %v337 = vsel %vm72, %v307, 0.0
  %338 = vadd.xlane.f32.xlu0 %v337
  %v339 = vpop.xlane.xlu0 %338
  %v340 = vsel %vm72, %v308, 0.0
  %341 = vadd.xlane.f32.xlu0 %v340
  %v342 = vpop.xlane.xlu0 %341
  %v343 = vsel %vm72, %v309, 0.0
  %344 = vadd.xlane.f32.xlu0 %v343
  %v345 = vpop.xlane.xlu0 %344
  %v346 = vsel %vm72, %v310, 0.0
  %347 = vadd.xlane.f32.xlu0 %v346
  %v348 = vpop.xlane.xlu0 %347
  %v349 = vsel %vm72, %v311, 0.0
  %350 = vadd.xlane.f32.xlu0 %v349
  %v351 = vpop.xlane.xlu0 %350
  %v352 = vsel %vm72, %v312, 0.0
  %353 = vadd.xlane.f32.xlu0 %v352
  %v354 = vpop.xlane.xlu0 %353
  %v355 = vsel %vm72, %v313, 0.0
  %356 = vadd.xlane.f32.xlu0 %v355
  %v357 = vpop.xlane.xlu0 %356
  %v358 = vsel %vm72, %v314, 0.0
  %359 = vadd.xlane.f32.xlu0 %v358
  %v360 = vpop.xlane.xlu0 %359
  %v361 = vsel %vm72, %v315, 0.0
  %362 = vadd.xlane.f32.xlu0 %v361
  %v363 = vpop.xlane.xlu0 %362
  %s364 = sld [smem:[#allocation2]]
  %v365 = vstv %s364
  %v366 = vadd.f32 %v318, %v365
  %v367 = vadd.f32 %v321, %v365
  %v368 = vadd.f32 %v324, %v365
  %v369 = vadd.f32 %v327, %v365
  %v370 = vadd.f32 %v330, %v365
  %v371 = vadd.f32 %v333, %v365
  %v372 = vadd.f32 %v336, %v365
  %v373 = vadd.f32 %v339, %v365
  %v374 = vadd.f32 %v342, %v365
  %v375 = vadd.f32 %v345, %v365
  %v376 = vadd.f32 %v348, %v365
  %v377 = vadd.f32 %v351, %v365
  %v378 = vadd.f32 %v354, %v365
  %v379 = vadd.f32 %v357, %v365
  %v380 = vadd.f32 %v360, %v365
  %v381 = vadd.f32 %v363, %v365
  %v398 = vlaneseq
  %v399 = vand.u32 %v398, 127
  %v400 = vperm.slane %v366, %v399
  %v401 = vadd.s32 %v399, 4294967288
  %v402 = vperm.slane %v367, %v401
  %vm403 = vcmask 130112
  %v404 = vsel %vm403, %v402, %v400
  %v405 = vadd.s32 %v399, 4294967280
  %v406 = vperm.slane %v368, %v405
  %vm407 = vcmask 195712
  %v408 = vsel %vm407, %v406, %v404
  %v409 = vadd.s32 %v399, 4294967272
  %v410 = vperm.slane %v369, %v409
  %vm411 = vcmask 261312
  %v412 = vsel %vm411, %v410, %v408
  %v413 = vadd.s32 %v399, 4294967264
  %v414 = vperm.slane %v370, %v413
  %vm415 = vcmask 326912
  %v416 = vsel %vm415, %v414, %v412
  %v417 = vadd.s32 %v399, 4294967256
  %v418 = vperm.slane %v371, %v417
  %vm419 = vcmask 392512
  %v420 = vsel %vm419, %v418, %v416
  %v421 = vadd.s32 %v399, 4294967248
  %v422 = vperm.slane %v372, %v421
  %vm423 = vcmask 458112
  %v424 = vsel %vm423, %v422, %v420
  %v425 = vadd.s32 %v399, 4294967240
  %v426 = vperm.slane %v373, %v425
  %vm427 = vcmask 523712
  %v428 = vsel %vm427, %v426, %v424
  %v429 = vadd.s32 %v399, 4294967232
  %v430 = vperm.slane %v374, %v429
  %vm431 = vcmask 589312
  %v432 = vsel %vm431, %v430, %v428
  %v433 = vadd.s32 %v399, 4294967224
  %v434 = vperm.slane %v375, %v433
  %vm435 = vcmask 654912
  %v436 = vsel %vm435, %v434, %v432
  %v437 = vadd.s32 %v399, 4294967216
  %v438 = vperm.slane %v376, %v437
  %vm439 = vcmask 720512
  %v440 = vsel %vm439, %v438, %v436
  %v441 = vadd.s32 %v399, 4294967208
  %v442 = vperm.slane %v377, %v441
  %vm443 = vcmask 786112
  %v444 = vsel %vm443, %v442, %v440
  %v445 = vadd.s32 %v399, 4294967200
  %v446 = vperm.slane %v378, %v445
  %vm447 = vcmask 851712
  %v448 = vsel %vm447, %v446, %v444
  %v449 = vadd.s32 %v399, 4294967192
  %v450 = vperm.slane %v379, %v449
  %vm451 = vcmask 917312
  %v452 = vsel %vm451, %v450, %v448
  %v453 = vadd.s32 %v399, 4294967184
  %v454 = vperm.slane %v380, %v453
  %vm455 = vcmask 982912
  %v456 = vsel %vm455, %v454, %v452
  %v457 = vadd.s32 %v399, 4294967176
  %v458 = vperm.slane %v381, %v457
  %vm459 = vcmask 1048512
  %v460 = vsel %vm459, %v458, %v456
  %462 = vst [vmem:[%s7] sm:$0x1] %v460
  // Predicated region
  $region30: #{ranknet_forward.1} parent=0 // pred_check
    _
  $region31: #{ranknet_forward.1} parent=0 // pred_check_branch
    %464 = sbr.rel (0) target = $region33
  $region32: #{ranknet_forward.1} parent=0 // pred_region
    _
  $region33: #{ranknet_forward.1} parent=0 // pred_fallthru
    _
  // Predicated region
  $region34: #{ranknet_forward.1} parent=0 // pred_check
    _
  $region35: #{ranknet_forward.1} parent=0 // pred_check_branch
    %466 = sbr.rel (0) target = $region37
  $region36: #{ranknet_forward.1} parent=0 // pred_region
    _
  $region37: #{ranknet_forward.1} parent=0 // pred_fallthru
    _

</llo_original>
